<compile_context>
chip_gen: v6e
topology: v6e:2x2x1
jax: 0.10.0
libtpu: 0.0.40
codegen_flags: <defaults>
</compile_context>

<pallas_src>
import functools

import jax
import jax.numpy as jnp
from jax import lax
from jax.experimental import pallas as pl
from jax.experimental.pallas import tpu as pltpu


def _round_up(x, m):
    return ((x + m - 1) // m) * m


# ----------------------------------------------------------------------------
# Tiled matmul + bias:  out = x @ w_t + b   (bf16 MXU operands, f32 accumulate)
# Used for (a) the hoisted time-parallel input projection and (b) the final FC.
# ----------------------------------------------------------------------------
def _matmul_bias_k1_kernel(x_ref, w_ref, b_ref, o_ref):
    # Single k-step: dot + bias straight to the output tile (no scratch).
    o_ref[...] = (jnp.dot(x_ref[...], w_ref[...],
                          preferred_element_type=jnp.float32)
                  + b_ref[...]).astype(o_ref.dtype)


def _matmul_bias_acc_kernel(x_ref, w_ref, b_ref, o_ref, acc_ref):
    @pl.when(pl.program_id(2) == 0)
    def _():
        acc_ref[...] = jnp.zeros_like(acc_ref)

    acc_ref[...] += jnp.dot(x_ref[...], w_ref[...],
                            preferred_element_type=jnp.float32)

    @pl.when(pl.program_id(2) == pl.num_programs(2) - 1)
    def _():
        o_ref[...] = (acc_ref[...] + b_ref[...]).astype(o_ref.dtype)


def matmul_bias(x, w_t, b, out_dtype=jnp.float32, m_pad_to=None):
    """x: (M, K), w_t: (K, N), b: (N,)  ->  (max(M, m_pad_to), N) out_dtype.
    x/w are fed to the MXU in bf16; accumulation is f32.  `m_pad_to` folds any
    extra row padding (e.g. time rounding of gx) into the matmul itself."""
    M, K = x.shape
    N = w_t.shape[1]
    Mt = max(M, m_pad_to) if m_pad_to is not None else M

    tm = 256 if Mt >= 256 else _round_up(Mt, 8)
    tn = 256 if N >= 256 else _round_up(N, 128)
    tk = K if K <= 512 else 512

    Mp, Np, Kp = _round_up(Mt, tm), _round_up(N, tn), _round_up(K, tk)

    xp = jnp.pad(x.astype(jnp.bfloat16), ((0, Mp - M), (0, Kp - K)))
    wp = jnp.pad(w_t.astype(jnp.bfloat16), ((0, Kp - K), (0, Np - N)))
    bp = jnp.pad(b.astype(jnp.float32), (0, Np - N))[None, :]

    if Kp // tk == 1:
        out = pl.pallas_call(
            _matmul_bias_k1_kernel,
            out_shape=jax.ShapeDtypeStruct((Mp, Np), out_dtype),
            grid_spec=pltpu.PrefetchScalarGridSpec(
                num_scalar_prefetch=0,
                grid=(Mp // tm, Np // tn),
                in_specs=[
                    pl.BlockSpec((tm, Kp), lambda i, j: (i, 0)),
                    pl.BlockSpec((Kp, tn), lambda i, j: (0, j)),
                    pl.BlockSpec((1, tn), lambda i, j: (0, j)),
                ],
                out_specs=pl.BlockSpec((tm, tn), lambda i, j: (i, j)),
            ),
            compiler_params=pltpu.CompilerParams(
                dimension_semantics=("parallel", "parallel"),
                vmem_limit_bytes=64 * 1024 * 1024,
            ),
        )(xp, wp, bp)
    else:
        out = pl.pallas_call(
            _matmul_bias_acc_kernel,
            out_shape=jax.ShapeDtypeStruct((Mp, Np), out_dtype),
            grid_spec=pltpu.PrefetchScalarGridSpec(
                num_scalar_prefetch=0,
                grid=(Mp // tm, Np // tn, Kp // tk),
                in_specs=[
                    pl.BlockSpec((tm, tk), lambda i, j, k: (i, k)),
                    pl.BlockSpec((tk, tn), lambda i, j, k: (k, j)),
                    pl.BlockSpec((1, tn), lambda i, j, k: (0, j)),
                ],
                out_specs=pl.BlockSpec((tm, tn), lambda i, j, k: (i, j)),
                scratch_shapes=[pltpu.VMEM((tm, tn), jnp.float32)],
            ),
            compiler_params=pltpu.CompilerParams(
                dimension_semantics=("parallel", "parallel", "arbitrary"),
                vmem_limit_bytes=64 * 1024 * 1024,
            ),
        )(xp, wp, bp)
    return out[:Mt, :N]


# ----------------------------------------------------------------------------
# Fused multi-layer LSTM recurrence.
#   gx  : (Tp, Bp, 4Hp) bf16  -- layer 0 input projection incl. bias (hoisted).
#   wih : (L, Hp, 4Hp)  bf16  -- layer l>=1 input weights (slot 0 unused/zero).
#   whh : (L, Hp, 4Hp)  bf16  -- recurrent weights for every layer.
#   bias: (L, 1, 4Hp)   f32   -- layer l>=1 bias (slot 0 zero: folded into gx).
# Per grid step one (t_blk, b_blk, Hp) lane-dense bf16 slab of the LAST layer's
# hidden state is written; per-layer h (bf16) / c (f32) live in VMEM scratch.
# Gate order follows PyTorch: i, f, g, o; gate slices are 128-lane aligned.
# ----------------------------------------------------------------------------
def _fused_lstm_kernel(gx_ref, wih_ref, whh_ref, b_ref, out_ref, h_sc, c_sc,
                       *, t_blk, hp, num_layers):
    @pl.when(pl.program_id(1) == 0)           # start of each batch block
    def _():
        h_sc[...] = jnp.zeros_like(h_sc)
        c_sc[...] = jnp.zeros_like(c_sc)

    def step(t, carry):
        gx_t = gx_ref[t]                      # (b_blk, 4Hp) bf16
        new_carry = []
        x_in = None                           # bf16 input to the current layer
        for l in range(num_layers):
            h_prev, c_prev = carry[l]         # bf16 / f32
            # Per-gate chunking: weight refs are sliced at the dot site so the
            # full (Hp, 4Hp) weight is never materialized as a long-lived value.
            acts = []
            for g in range(4):
                pre = jnp.dot(h_prev, whh_ref[l, :, g * hp:(g + 1) * hp],
                              preferred_element_type=jnp.float32)
                if l == 0:
                    pre = pre + gx_t[:, g * hp:(g + 1) * hp].astype(jnp.float32)
                else:
                    pre = pre + jnp.dot(x_in, wih_ref[l, :, g * hp:(g + 1) * hp],
                                        preferred_element_type=jnp.float32)
                    pre = pre + b_ref[l, :, g * hp:(g + 1) * hp]
                acts.append(pre)
            i_g = jax.nn.sigmoid(acts[0])
            f_g = jax.nn.sigmoid(acts[1])
            g_g = jnp.tanh(acts[2])
            o_g = jax.nn.sigmoid(acts[3])
            c_new = f_g * c_prev + i_g * g_g                  # f32
            h_new = (o_g * jnp.tanh(c_new)).astype(jnp.bfloat16)
            new_carry.append((h_new, c_new))
            x_in = h_new
        out_ref[t] = x_in                                      # last layer's h
        return tuple(new_carry)

    init = tuple((h_sc[l], c_sc[l]) for l in range(num_layers))
    final = lax.fori_loop(0, t_blk, step, init, unroll=True)
    for l in range(num_layers):
        h_sc[l] = final[l][0]
        c_sc[l] = final[l][1]


def fused_lstm_recurrence(gx, wih_stack, whh_stack, bias_stack, hp, t_blk):
    Tp, Bp, G = gx.shape
    L = whh_stack.shape[0]

    # v7x: split the batch over the 2 TensorCores when it is large enough.
    n_bb = 2 if (Bp >= 16 and Bp % 16 == 0) else 1
    b_blk = Bp // n_bb

    kernel = functools.partial(_fused_lstm_kernel, t_blk=t_blk, hp=hp,
                               num_layers=L)
    # TODO(synk): pipeline_mode=pl.Buffered(1) on the constant weight specs and
    # explicit MXU staging (matmul_push_rhs/acc_lhs/pop) are further wins for
    # large Hp; skipped here for portability.
    out = pl.pallas_call(
        kernel,
        out_shape=jax.ShapeDtypeStruct((Tp, Bp, hp), jnp.bfloat16),
        grid_spec=pltpu.PrefetchScalarGridSpec(
            num_scalar_prefetch=0,
            grid=(n_bb, Tp // t_blk),
            in_specs=[
                pl.BlockSpec((t_blk, b_blk, G), lambda nb, tb: (tb, nb, 0)),
                pl.BlockSpec((L, hp, G), lambda nb, tb: (0, 0, 0)),
                pl.BlockSpec((L, hp, G), lambda nb, tb: (0, 0, 0)),
                pl.BlockSpec((L, 1, G), lambda nb, tb: (0, 0, 0)),
            ],
            out_specs=pl.BlockSpec((t_blk, b_blk, hp), lambda nb, tb: (tb, nb, 0)),
            scratch_shapes=[
                pltpu.VMEM((L, b_blk, hp), jnp.bfloat16),   # per-layer h
                pltpu.VMEM((L, b_blk, hp), jnp.float32),    # per-layer c
            ],
        ),
        compiler_params=pltpu.CompilerParams(
            dimension_semantics=("parallel", "arbitrary"),
            vmem_limit_bytes=64 * 1024 * 1024,
        ),
    )(gx, wih_stack, whh_stack, bias_stack)
    return out


# ----------------------------------------------------------------------------
# Weight padding helpers: pad each PyTorch gate block (i,f,g,o) from H to Hp
# columns with zeros so gate slices are 128-lane aligned.  Padded hidden lanes
# stay exactly 0 through the recurrence (zero pre-activation -> g=0 -> c=h=0).
# ----------------------------------------------------------------------------
def _pad_gate_cols(w_t, h, hp):
    in_dim = w_t.shape[0]
    return jnp.pad(w_t.reshape(in_dim, 4, h),
                   ((0, 0), (0, 0), (0, hp - h))).reshape(in_dim, 4 * hp)


def _pad_gate_bias(b, h, hp):
    return jnp.pad(b.reshape(4, h), ((0, 0), (0, hp - h))).reshape(4 * hp)


# ----------------------------------------------------------------------------
# Full model forward (equivalent to VanillaLSTM.forward, eval-mode dropout).
# ----------------------------------------------------------------------------
def vanilla_lstm_forward(params, input_id):
    """input_id: (T, B) int32 token ids. Returns logits (T, B, vocab_size)."""
    T, B = input_id.shape
    Bp = _round_up(max(B, 8), 8)                       # sublane-align the batch
    layers = params["lstm"]
    L = len(layers)
    H = layers[0]["w_hh"].shape[1]
    Hp = _round_up(H, 128)

    # Embedding lookup (data-dependent gather): plain-JAX glue.
    x = jnp.take(params["embedding"], input_id, axis=0)
    x = jnp.pad(x.astype(jnp.bfloat16), ((0, 0), (0, Bp - B), (0, 0)))  # (T,Bp,E)
    E = x.shape[-1]

    # Time-block size budgeted against VMEM (bf16 gx + out blocks, 2 buffers).
    per_step_bytes = Bp * (4 * Hp + Hp) * 2 * 2
    t_blk = max(1, min(32, T, (24 * 1024 * 1024) // max(per_step_bytes, 1)))
    Tp = _round_up(T, t_blk)

    # (1) Hoisted, time-parallel layer-0 input projection (bf16 output).  The
    # T -> Tp rounding is folded into the matmul's M padding (no separate pad).
    w_ih0 = jnp.asarray(layers[0]["w_ih"], jnp.float32).T          # (E, 4H)
    w_ih0 = _pad_gate_cols(w_ih0, H, Hp)                           # (E, 4Hp)
    bias0 = _pad_gate_bias(
        (layers[0]["b_ih"] + layers[0]["b_hh"]).astype(jnp.float32), H, Hp)
    gx = matmul_bias(x.reshape(T * Bp, E), w_ih0, bias0,
                     out_dtype=jnp.bfloat16, m_pad_to=Tp * Bp)     # (Tp*Bp,4Hp)
    gx = gx.reshape(Tp, Bp, 4 * Hp)

    # (2) Stacked per-layer weights for the fused recurrence kernel.
    wih_list, whh_list, bias_list = [], [], []
    for l, layer in enumerate(layers):
        whh_t = jnp.asarray(layer["w_hh"], jnp.float32).T          # (H, 4H)
        whh_t = jnp.pad(whh_t, ((0, Hp - H), (0, 0)))
        whh_list.append(_pad_gate_cols(whh_t, H, Hp))              # (Hp, 4Hp)
        if l == 0:
            wih_list.append(jnp.zeros((Hp, 4 * Hp), jnp.float32))  # unused slot
            bias_list.append(jnp.zeros((4 * Hp,), jnp.float32))    # folded in gx
        else:
            wih_t = jnp.asarray(layer["w_ih"], jnp.float32).T      # (H, 4H)
            wih_t = jnp.pad(wih_t, ((0, Hp - H), (0, 0)))
            wih_list.append(_pad_gate_cols(wih_t, H, Hp))          # (Hp, 4Hp)
            bias_list.append(_pad_gate_bias(
                (layer["b_ih"] + layer["b_hh"]).astype(jnp.float32), H, Hp))
    wih_stack = jnp.stack(wih_list).astype(jnp.bfloat16)           # (L, Hp, 4Hp)
    whh_stack = jnp.stack(whh_list).astype(jnp.bfloat16)           # (L, Hp, 4Hp)
    bias_stack = jnp.stack(bias_list)[:, None, :].astype(jnp.float32)  # (L,1,4Hp)

    # (3) Fused multi-layer sequential recurrence (bf16 output).
    out = fused_lstm_recurrence(gx, wih_stack, whh_stack, bias_stack, Hp, t_blk)
    # TODO(synk): final (h_n, c_n) of padded timesteps (t >= T) are not masked;
    # the forward never returns them so outputs below are unaffected.

    # TODO(synk): nn.Dropout is identity at inference time; no stochastic mask.

    # (4) Final FC over the (sliced) last-layer hidden states.
    V = params["fc_w"].shape[0]
    fc_wt = jnp.asarray(params["fc_w"], jnp.float32).T             # (H, V)
    fc_wt = jnp.pad(fc_wt, ((0, Hp - H), (0, 0)))                  # zero pad rows
    logits = matmul_bias(out[:T].reshape(T * Bp, Hp), fc_wt,
                         jnp.asarray(params["fc_b"], jnp.float32)) # (T*Bp, V) f32
    return logits.reshape(T, Bp, V)[:, :B, :]


def init_params(key, vocab_size, embedding_dim, hidden_dim, num_layers):
    keys = jax.random.split(key, 2 + 4 * num_layers)
    k = 1.0 / jnp.sqrt(hidden_dim)
    params = {
        "embedding": jax.random.normal(keys[0], (vocab_size, embedding_dim),
                                       jnp.float32),
        "lstm": [],
        "fc_w": jax.random.uniform(keys[1], (vocab_size, hidden_dim),
                                   jnp.float32, -k, k),
        "fc_b": jnp.zeros((vocab_size,), jnp.float32),
    }
    for layer in range(num_layers):
        in_dim = embedding_dim if layer == 0 else hidden_dim
        kk = keys[2 + 4 * layer: 2 + 4 * (layer + 1)]
        params["lstm"].append({
            "w_ih": jax.random.uniform(kk[0], (4 * hidden_dim, in_dim),
                                       jnp.float32, -k, k),
            "w_hh": jax.random.uniform(kk[1], (4 * hidden_dim, hidden_dim),
                                       jnp.float32, -k, k),
            "b_ih": jax.random.uniform(kk[2], (4 * hidden_dim,),
                                       jnp.float32, -k, k),
            "b_hh": jax.random.uniform(kk[3], (4 * hidden_dim,),
                                       jnp.float32, -k, k),
        })
    return params


if __name__ == "__main__":
    vocab_size = 64
    embedding_dim = 16
    hidden_dim = 32
    num_layers = 2
    seq_len = 8
    batch = 2

    key = jax.random.PRNGKey(0)
    pkey, ikey = jax.random.split(key)
    params = init_params(pkey, vocab_size, embedding_dim, hidden_dim, num_layers)
    input_id = jax.random.randint(ikey, (seq_len, batch), 0, vocab_size,
                                  dtype=jnp.int32)

    logits = vanilla_lstm_forward(params, input_id)
    jax.block_until_ready(logits)
    assert logits.shape == (seq_len, batch, vocab_size)
    print("KERNEL_OK")
</pallas_src>

<mosaic_0001>
module attributes {stable_mosaic.version = 11 : i64} {
  func.func @_matmul_bias_k1_kernel(%arg0: i32, %arg1: i32, %arg2: memref<64x16xbf16, #tpu.memory_space<vmem>>, %arg3: memref<16x256xbf16, #tpu.memory_space<vmem>>, %arg4: memref<1x256xf32, #tpu.memory_space<vmem>>, %arg5: memref<64x256xbf16, #tpu.memory_space<vmem>>) attributes {dimension_semantics = [#tpu.dimension_semantics<parallel>, #tpu.dimension_semantics<parallel>], iteration_bounds = array<i64: 1, 2>, scalar_prefetch = 0 : i64, scratch_operands = 0 : i64, tpu.core_type = #tpu.core_type<tc>, window_params = [{transform_indices = @transform_0, window_bounds = array<i64: 64, 16>}, {transform_indices = @transform_1, window_bounds = array<i64: 16, 256>}, {transform_indices = @transform_2, window_bounds = array<i64: 1, 256>}, {transform_indices = @transform_3, window_bounds = array<i64: 64, 256>}]} {
    %c0 = arith.constant 0 : index
    %c0_0 = arith.constant 0 : index
    %0 = vector.load %arg2[%c0, %c0_0] : memref<64x16xbf16, #tpu.memory_space<vmem>>, vector<64x16xbf16>
    %c0_1 = arith.constant 0 : index
    %c0_2 = arith.constant 0 : index
    %1 = vector.load %arg3[%c0_1, %c0_2] : memref<16x256xbf16, #tpu.memory_space<vmem>>, vector<16x256xbf16>
    %cst = arith.constant dense<0.000000e+00> : vector<64x256xf32>
    %2 = tpu.matmul %0, %1, %cst {dimension_numbers = #tpu.dot_dimension_numbers<[1], [0], [0], [1], [0, 0, 1, 1], [], []>} : vector<64x16xbf16>, vector<16x256xbf16>, vector<64x256xf32> -> vector<64x256xf32>
    %c0_3 = arith.constant 0 : index
    %c0_4 = arith.constant 0 : index
    %3 = vector.load %arg4[%c0_3, %c0_4] : memref<1x256xf32, #tpu.memory_space<vmem>>, vector<1x256xf32>
    %4 = vector.broadcast %3 : vector<1x256xf32> to vector<64x256xf32>
    %5 = arith.addf %2, %4 : vector<64x256xf32>
    %6 = arith.truncf %5 : vector<64x256xf32> to vector<64x256xbf16>
    %c0_5 = arith.constant 0 : index
    %c0_6 = arith.constant 0 : index
    %7 = vector.load %arg5[%c0_5, %c0_6] : memref<64x256xbf16, #tpu.memory_space<vmem>>, vector<64x256xbf16>
    tpu.vector_store %arg5[%c0_5, %c0_6], %6 {strides = array<i32>} : memref<64x256xbf16, #tpu.memory_space<vmem>>, vector<64x256xbf16>,
    return
  }
  func.func @transform_0(%arg0: i32, %arg1: i32) -> (i32, i32) {
    %c0_i32 = arith.constant 0 : i32
    %c0_i32_0 = arith.constant 0 : i32
    return %arg0, %c0_i32 : i32, i32
  }
  func.func @transform_1(%arg0: i32, %arg1: i32) -> (i32, i32) {
    %c0_i32 = arith.constant 0 : i32
    %c0_i32_0 = arith.constant 0 : i32
    return %c0_i32, %arg1 : i32, i32
  }
  func.func @transform_2(%arg0: i32, %arg1: i32) -> (i32, i32) {
    %c0_i32 = arith.constant 0 : i32
    %c0_i32_0 = arith.constant 0 : i32
    return %c0_i32, %arg1 : i32, i32
  }
  func.func @transform_3(%arg0: i32, %arg1: i32) -> (i32, i32) {
    %c0_i32 = arith.constant 0 : i32
    return %arg0, %arg1 : i32, i32
  }
}

</mosaic_0001>

<llo_original>
// kernel: tpu_custom_call.1
$region0: #{tpu_custom_call.1}
  #allocation0 [shape = 'u32[]', space=smem, size = 0x4, offset = 0x4, fixed_abs, tag = 'smem constant byte address 0x4 - core index']
  #allocation1 [shape = 'u32[144,128]{1,0:T(1,128)}', space=vmem, size = 0x12000, scoped, tag = 'internal scratch']
  %s0 = inlined_call_operand.vmem [shape: bf16[64,16], index: 0, kind: input, shape index: {}]
  %s1 = inlined_call_operand.vmem [shape: bf16[16,512], index: 1, kind: input, shape index: {}]
  %s2 = inlined_call_operand.vmem [shape: f32[1,512], index: 2, kind: input, shape index: {}]
  %s3 = inlined_call_operand.hbm [shape: bf16[64,512], index: 3, kind: output, shape index: {}]
  %s4 = sld [smem:[#allocation0]]
  $region83: #{tpu_custom_call.1} parent=0
    _
  %s6 = ssub.s32 1, %s4
  %s7 = scalar_select 0, %s6, %s4
  $region1: #{tpu_custom_call.1} parent=0
    #allocation2 [shape = 'u8[16384]{0}', space=vmem, size = 0x4000, scoped, tag = 'input window, operand 1']
    #allocation3 [shape = 'u8[65536]{0}', space=vmem, size = 0x10000, scoped, tag = 'output window, operand 0']
    #allocation4 [shape = 's32[2]{0}', space=sflag, size = 0x8, scoped, tag = 'scoped memory for tpu_custom_call.1']
    %8 = vsyncpa [#allocation4], 0
    %s9 = scalar_lea.sflag [#allocation4], 1
    %10 = vsyncpa %s9, 0
    loop: start=0, step=1, limit=4
    $region2: #{tpu_custom_call.1} parent=1 // loop_pre_header
      _
    $region3: #{tpu_custom_call.1} parent=1 // loop_header
      %s12 = sphi 0, %s16
      %p13 = scmp.ge.s32.totalorder %s12, 4
      %s19 = sphi 0, %s31
      %s20 = sphi 0, %s27
      %s21 = sphi 0, %s19
      %s22 = sphi 0, %s20
      %s23 = sphi 0, %s21
      %s24 = sphi 0, %s22
      %s34 = sphi 0, %s36
      %s37 = sphi 0, %s34
      %s38 = sphi 0, %s37
      %s54 = sphi 0, %s38
      %s60 = sphi 0, %s62
      %s63 = sphi 0, %s60
      %s64 = sphi 0, %s63
      %s80 = sphi 0, %s64
      %s86 = sphi 0, %s88
      %s89 = sphi 0, %s86
      %s90 = sphi 0, %s89
      %s106 = sphi 0, %s90
      %s114 = sphi 0, %s116
      %s117 = sphi 0, %s114
      %s118 = sphi 0, %s117
      %s134 = sphi 0, %s118
    $region4: #{tpu_custom_call.1} parent=1 // loop_header_branch
      %15 = sbr.rel (%p13) target = $region8
    $region5: #{tpu_custom_call.1} parent=1 // loop_body
      %s17 = ssub.s32 %s12, 1
      %s18 = ssub.s32 %s12, 2
      %s25 = sadd.s32 1, %s20
      %p26 = scmp.ge.s32.totalorder %s25, 2
      %s27 = scalar_select %p26, 0, %s25
      %s28 = sadd.s32 1, %s19
      %s29 = scalar_select %p26, %s28, %s19
      %p30 = scmp.ge.s32.totalorder %s29, 1
      %s31 = scalar_select %p30, 0, %s29
      %s32 = ssub.s32 %s19, %s31
      %p33 = scmp.eq.s32.totalorder %s32, 0
      %s35 = sadd.s32 %s34, 1
      %s36 = scalar_select %p33, %s34, %s35
      %p39 = pneg %p33
      %p40 = scmp.eq.s32.totalorder %s12, 1
      %p41 = por %p39, %p40
      %p42 = scmp.ne.s32.totalorder %s34, %s37
      %p43 = scmp.eq.s32.totalorder %s12, 0
      %p44 = por %p42, %p43
      %p45 = scmp.ne.s32.totalorder %s34, %s37
      %p46 = scmp.eq.s32.totalorder %s17, 1
      %p47 = por %p45, %p46
      %p48 = scmp.ne.s32.totalorder %s37, %s38
      %p49 = scmp.eq.s32.totalorder %s17, 0
      %p50 = por %p48, %p49
      %p51 = scmp.ne.s32.totalorder %s37, %s38
      %p52 = scmp.eq.s32.totalorder %s18, 1
      %p53 = por %p51, %p52
      %p55 = scmp.ne.s32.totalorder %s38, %s54
      %p56 = scmp.eq.s32.totalorder %s18, 0
      %p57 = por %p55, %p56
      %s58 = ssub.s32 %s20, %s27
      %p59 = scmp.eq.s32.totalorder %s58, 0
      %s61 = sadd.s32 %s60, 1
      %s62 = scalar_select %p59, %s60, %s61
      %p65 = pneg %p59
      %p66 = scmp.eq.s32.totalorder %s12, 1
      %p67 = por %p65, %p66
      %p68 = scmp.ne.s32.totalorder %s60, %s63
      %p69 = scmp.eq.s32.totalorder %s12, 0
      %p70 = por %p68, %p69
      %p71 = scmp.ne.s32.totalorder %s60, %s63
      %p72 = scmp.eq.s32.totalorder %s17, 1
      %p73 = por %p71, %p72
      %p74 = scmp.ne.s32.totalorder %s63, %s64
      %p75 = scmp.eq.s32.totalorder %s17, 0
      %p76 = por %p74, %p75
      %p77 = scmp.ne.s32.totalorder %s63, %s64
      %p78 = scmp.eq.s32.totalorder %s18, 1
      %p79 = por %p77, %p78
      %p81 = scmp.ne.s32.totalorder %s64, %s80
      %p82 = scmp.eq.s32.totalorder %s18, 0
      %p83 = por %p81, %p82
      %s84 = ssub.s32 %s20, %s27
      %p85 = scmp.eq.s32.totalorder %s84, 0
      %s87 = sadd.s32 %s86, 1
      %s88 = scalar_select %p85, %s86, %s87
      %p91 = pneg %p85
      %p92 = scmp.eq.s32.totalorder %s12, 1
      %p93 = por %p91, %p92
      %p94 = scmp.ne.s32.totalorder %s86, %s89
      %p95 = scmp.eq.s32.totalorder %s12, 0
      %p96 = por %p94, %p95
      %p97 = scmp.ne.s32.totalorder %s86, %s89
      %p98 = scmp.eq.s32.totalorder %s17, 1
      %p99 = por %p97, %p98
      %p100 = scmp.ne.s32.totalorder %s89, %s90
      %p101 = scmp.eq.s32.totalorder %s17, 0
      %p102 = por %p100, %p101
      %p103 = scmp.ne.s32.totalorder %s89, %s90
      %p104 = scmp.eq.s32.totalorder %s18, 1
      %p105 = por %p103, %p104
      %p107 = scmp.ne.s32.totalorder %s90, %s106
      %p108 = scmp.eq.s32.totalorder %s18, 0
      %p109 = por %p107, %p108
      %s110 = ssub.s32 %s19, %s31
      %s111 = ssub.s32 %s20, %s27
      %s112 = sor.u32 %s110, %s111
      %p113 = scmp.eq.s32.totalorder %s112, 0
      %s115 = sadd.s32 %s114, 1
      %s116 = scalar_select %p113, %s114, %s115
      %p119 = pneg %p113
      %p120 = scmp.eq.s32.totalorder %s12, 1
      %p121 = por %p119, %p120
      %p122 = scmp.ne.s32.totalorder %s114, %s117
      %p123 = scmp.eq.s32.totalorder %s12, 0
      %p124 = por %p122, %p123
      %p125 = scmp.ne.s32.totalorder %s114, %s117
      %p126 = scmp.eq.s32.totalorder %s17, 1
      %p127 = por %p125, %p126
      %p128 = scmp.ne.s32.totalorder %s117, %s118
      %p129 = scmp.eq.s32.totalorder %s17, 0
      %p130 = por %p128, %p129
      %p131 = scmp.ne.s32.totalorder %s117, %s118
      %p132 = scmp.eq.s32.totalorder %s18, 1
      %p133 = por %p131, %p132
      %p135 = scmp.ne.s32.totalorder %s118, %s134
      %p136 = scmp.eq.s32.totalorder %s18, 0
      %p137 = por %p135, %p136
      %p138 = scmp.le.s32.totalorder 1, %s12
      %p139 = scmp.lt.s32.totalorder %s12, 3
      %p140 = pnand %p138, %p139
      %p141 = pneg %p140
      // Predicated region
      $region9: #{tpu_custom_call.1} parent=5 // pred_check
        _
      $region10: #{tpu_custom_call.1} parent=5 // pred_check_branch
        %143 = sbr.rel (%p140) target = $region12
      $region11: #{tpu_custom_call.1} parent=5 // pred_region
        %s144 = ssub.s32 %s12, 1
        // Predicated region
        $region13: #{tpu_custom_call.1} parent=11 // pred_check
          %p145 = pneg %p50
        $region14: #{tpu_custom_call.1} parent=11 // pred_check_branch
          %147 = sbr.rel (%p145) target = $region16
        $region15: #{tpu_custom_call.1} parent=11 // pred_region
          %s148 = smul.u32 8, %s21
          %p149 = scmp.lt.s32.totalorder %s148, 7
          %s150 = scalar_select %p149, %s148, 7
          %s151 = smul.addr %s150, 4
          %s152 = scalar_lea.vmem %s0, %s151
          %s153 = smul.u32 8, %s21
        $region16: #{tpu_custom_call.1} parent=11 // pred_fallthru
          _
      $region12: #{tpu_custom_call.1} parent=5 // pred_fallthru
        _
      %p154 = scmp.lt.s32.totalorder %s12, 2
      // Predicated region
      $region17: #{tpu_custom_call.1} parent=5 // pred_check
        %p155 = pneg %p154
      $region18: #{tpu_custom_call.1} parent=5 // pred_check_branch
        %157 = sbr.rel (%p155) target = $region20
      $region19: #{tpu_custom_call.1} parent=5 // pred_region
        // Predicated region
        $region21: #{tpu_custom_call.1} parent=19 // pred_check
          %p158 = pneg %p70
        $region22: #{tpu_custom_call.1} parent=19 // pred_check_branch
          %160 = sbr.rel (%p158) target = $region24
        $region23: #{tpu_custom_call.1} parent=19 // pred_region
          %s161 = sand.u32 %s60, 1
          %s162 = sand.u32 %s60, 1
          %s163 = smul.addr %s162, 16
          %s164 = scalar_lea.vmem [#allocation2], %s163
          %s165 = smul.u32 2, %s20
          %s166 = smul.addr %s165, 4
          %s167 = scalar_lea.vmem %s1, %s166
          // Predicated region
          $region25: #{tpu_custom_call.1} parent=23 // pred_check
            _
          $region26: #{tpu_custom_call.1} parent=23 // pred_check_branch
            %169 = sbr.rel (0) target = $region28
          $region27: #{tpu_custom_call.1} parent=23 // pred_region
            // Predicated region
            $region29: #{tpu_custom_call.1} parent=27 // pred_check
              _
            $region30: #{tpu_custom_call.1} parent=27 // pred_check_branch
              %171 = sbr.rel (0) target = $region32
            $region31: #{tpu_custom_call.1} parent=27 // pred_region
              // Predicated region
              $region44: #{tpu_custom_call.1} parent=31 // pred_check
                _
              $region45: #{tpu_custom_call.1} parent=31 // pred_check_branch
                %189 = sbr.rel (0) target = $region47
              $region46: #{tpu_custom_call.1} parent=31 // pred_region
                loop: start=0, step=1, limit=1
                $region48: #{tpu_custom_call.1} parent=46 // loop_pre_header
                  _
                $region49: #{tpu_custom_call.1} parent=46 // loop_header
                  %s191 = sphi 0, %s195
                  %p192 = scmp.ge.s32.totalorder %s191, 1
                  %s196 = sphi %s167, %s167
                  %s197 = sphi %s164, %s164
                $region50: #{tpu_custom_call.1} parent=46 // loop_header_branch
                  %194 = sbr.rel (%p192) target = $region54
                $region51: #{tpu_custom_call.1} parent=46 // loop_body
                  %v198 = vld [vmem:[%s196] sm:$0xff]
                  %199 = vst [vmem:[%s197] sm:$0xff] %v198
                  %v200 = vld [vmem:[%s196 + $0x10] sm:$0xff]
                  %201 = vst [vmem:[%s197 + $0x8] sm:$0xff] %v200
                $region52: #{tpu_custom_call.1} parent=46 // loop_footer
                  %s195 = sadd.s32 1, %s191
                $region53: #{tpu_custom_call.1} parent=46 // loop_footer_branch
                  %190 = sbr.rel target = $region49
                $region54: #{tpu_custom_call.1} parent=46 // loop_exit
                  _
              $region47: #{tpu_custom_call.1} parent=31 // pred_fallthru
                _
              // Predicated region
              $region55: #{tpu_custom_call.1} parent=31 // pred_check
                _
              $region56: #{tpu_custom_call.1} parent=31 // pred_check_branch
                %203 = sbr.rel target = $region58
              $region57: #{tpu_custom_call.1} parent=31 // pred_region
                _
              $region58: #{tpu_custom_call.1} parent=31 // pred_fallthru
                _
            $region32: #{tpu_custom_call.1} parent=27 // pred_fallthru
              _
            // Predicated region
            $region33: #{tpu_custom_call.1} parent=27 // pred_check
              _
            $region34: #{tpu_custom_call.1} parent=27 // pred_check_branch
              %173 = sbr.rel target = $region36
            $region35: #{tpu_custom_call.1} parent=27 // pred_region
              %s175 = ssub.s32 256, 1
              loop: start=0, step=1, limit=1
              $region37: #{tpu_custom_call.1} parent=35 // loop_pre_header
                _
              $region38: #{tpu_custom_call.1} parent=35 // loop_header
                %s177 = sphi 0, %s181
                %p178 = scmp.ge.s32.totalorder %s177, 1
                %s182 = sphi %s167, %s167
                %s183 = sphi %s164, %s164
              $region39: #{tpu_custom_call.1} parent=35 // loop_header_branch
                %180 = sbr.rel (%p178) target = $region43
              $region40: #{tpu_custom_call.1} parent=35 // loop_body
                %v184 = vld [vmem:[%s182] sm:%s175]
                %185 = vst [vmem:[%s183] sm:%s175] %v184
                %v186 = vld [vmem:[%s182 + $0x10] sm:%s175]
                %187 = vst [vmem:[%s183 + $0x8] sm:%s175] %v186
              $region41: #{tpu_custom_call.1} parent=35 // loop_footer
                %s181 = sadd.s32 1, %s177
              $region42: #{tpu_custom_call.1} parent=35 // loop_footer_branch
                %176 = sbr.rel target = $region38
              $region43: #{tpu_custom_call.1} parent=35 // loop_exit
                _
            $region36: #{tpu_custom_call.1} parent=27 // pred_fallthru
              _
          $region28: #{tpu_custom_call.1} parent=23 // pred_fallthru
            _
          %204 = vnop
        $region24: #{tpu_custom_call.1} parent=19 // pred_fallthru
          _
        // Predicated region
        $region59: #{tpu_custom_call.1} parent=19 // pred_check
          %p205 = pneg %p96
        $region60: #{tpu_custom_call.1} parent=19 // pred_check_branch
          %207 = sbr.rel (%p205) target = $region62
        $region61: #{tpu_custom_call.1} parent=19 // pred_region
          %s208 = smul.u32 2, %s20
          %p209 = scmp.lt.s32.totalorder %s208, 3
          %s210 = scalar_select %p209, %s208, 3
          %s211 = scalar_lea.vmem %s2, %s210
          %s212 = smul.u32 2, %s20
        $region62: #{tpu_custom_call.1} parent=19 // pred_fallthru
          _
      $region20: #{tpu_custom_call.1} parent=5 // pred_fallthru
        _
      %p213 = scmp.le.s32.totalorder 1, %s12
      %p214 = scmp.lt.s32.totalorder %s12, 3
      %p215 = pnand %p213, %p214
      %p216 = pneg %p215
      // Predicated region
      $region63: #{tpu_custom_call.1} parent=5 // pred_check
        _
      $region64: #{tpu_custom_call.1} parent=5 // pred_check_branch
        %218 = sbr.rel (%p215) target = $region66
      $region65: #{tpu_custom_call.1} parent=5 // pred_region
        %s219 = ssub.s32 %s12, 1
        %s220 = sand.u32 %s63, 1
        %s221 = sand.u32 %s63, 1
        %s222 = smul.addr %s221, 16
        %s223 = scalar_lea.vmem [#allocation2], %s222
        // Predicated region
        $region67: #{tpu_custom_call.1} parent=65 // pred_check
          %p224 = pneg %p76
        $region68: #{tpu_custom_call.1} parent=65 // pred_check_branch
          %226 = sbr.rel (%p224) target = $region70
        $region69: #{tpu_custom_call.1} parent=65 // pred_region
          _
        $region70: #{tpu_custom_call.1} parent=65 // pred_fallthru
          _
        %s227 = smul.u32 8, %s21
        %p228 = scmp.lt.s32.totalorder %s227, 7
        %s229 = scalar_select %p228, %s227, 7
        %s230 = smul.addr %s229, 4
        %s231 = scalar_lea.vmem %s0, %s230
        %p232 = pneg %p50
        %p233 = pneg %p47
        %s234 = sand.u32 %s63, 1
        %s235 = sand.u32 %s63, 1
        %s236 = smul.addr %s235, 16
        %s237 = scalar_lea.vmem [#allocation2], %s236
        %p238 = pneg %p76
        %p239 = pneg %p73
        %s240 = smul.u32 2, %s22
        %p241 = scmp.lt.s32.totalorder %s240, 3
        %s242 = scalar_select %p241, %s240, 3
        %s243 = scalar_lea.vmem %s2, %s242
        %p244 = pneg %p102
        %p245 = pneg %p99
        %p246 = pneg %p130
        %p247 = pneg %p127
        %s248 = sand.u32 %s117, 1
        %s249 = scalar_lea.sflag [#allocation4], %s248
        %s250 = sand.u32 %s117, 1
        %s251 = smul.addr %s250, 64
        %s252 = scalar_lea.vmem [#allocation3], %s251
        %s253 = smul.u32 8, %s21
        %p254 = scmp.lt.s32.totalorder %s253, 7
        %s255 = scalar_select %p254, %s253, 7
        %s256 = smul.addr %s255, 4
        %s257 = scalar_lea.vmem %s0, %s256
        %s258 = smul.u32 8, %s21
        %s259 = smul.u32 2, %s22
        %s260 = smul.u32 2, %s22
        %p261 = scmp.lt.s32.totalorder %s260, 3
        %s262 = scalar_select %p261, %s260, 3
        %s263 = scalar_lea.vmem %s2, %s262
        %s264 = smul.u32 2, %s22
        %s265 = smul.u32 8, %s21
        %s266 = smul.u32 2, %s22
        %v268 = vld [vmem:[%s257] sm:$0xf]
        %v269 = vld [vmem:[%s257 + $0x4] sm:$0xf]
        %v270 = vld [vmem:[%s257 + $0x8] sm:$0xf]
        %v271 = vld [vmem:[%s257 + $0xc] sm:$0xf]
        %v272 = vld [vmem:[%s257 + $0x10] sm:$0xf]
        %v273 = vld [vmem:[%s257 + $0x14] sm:$0xf]
        %v274 = vld [vmem:[%s257 + $0x18] sm:$0xf]
        %v275 = vld [vmem:[%s257 + $0x1c] sm:$0xf]
        %v276 = vld [vmem:[%s223] sm:$0xff]
        %v277 = vld [vmem:[%s223 + $0x8] sm:$0xff]
        %v278 = vld [vmem:[%s263] sm:$0x3]
        %v280 = vlaneseq
        %v281 = vshrl.u32 %v280, 7
        %v282 = vsub.s32 0, %v281
        %v283 = vrot.slane %v278, %v282
        %v284 = vlaneseq
        %v285 = vshrl.u32 %v284, 7
        %v286 = vsub.s32 1, %v285
        %v287 = vrot.slane %v278, %v286
        %v298 = vunpack.c.l.b16 %v268
        %v299 = vunpack.c.l.b16 %v269
        %v300 = vunpack.c.l.b16 %v270
        %v301 = vunpack.c.l.b16 %v271
        %v302 = vunpack.c.l.b16 %v272
        %v303 = vunpack.c.l.b16 %v273
        %v304 = vunpack.c.l.b16 %v274
        %v305 = vunpack.c.l.b16 %v275
        %v306 = vpack.c.b16 %v299, %v298
        %v307 = vpack.c.b16 %v301, %v300
        %v308 = vpack.c.b16 %v303, %v302
        %v309 = vpack.c.b16 %v305, %v304
        %v312 = vunpack.c.l.b16 %v276
        %v313 = vunpack.c.h.b16 %v276
        %v314 = vunpack.c.l.b16 %v277
        %v315 = vunpack.c.h.b16 %v277
        %v316 = vpack.c.b16 %v314, %v312
        %v317 = vpack.c.b16 %v315, %v313
        %vm320 = vcmask 130048
        %v322 = vsel %vm320, %v306, 0
        %v325 = vsel %vm320, %v307, 0
        %v328 = vsel %vm320, %v308, 0
        %v331 = vsel %vm320, %v309, 0
        %333 = vmatprep.subr.bf16.mxu0 0
        %334 = vmatpush1.bf16.msra.mxu0 0
        %335 = vmatprep.subr.bf16.mxu0 0
        %336 = vmatpush1.bf16.msra.mxu0 0
        %337 = vmatprep.subr.bf16.mxu0 0
        %338 = vmatpush1.bf16.msra.mxu0 0
        %339 = vmatprep.subr.bf16.mxu0 0
        %340 = vmatpush1.bf16.msra.mxu0 0
        %341 = vmatprep.subr.bf16.mxu0 0
        %342 = vmatpush1.bf16.msra.mxu0 0
        %343 = vmatprep.subr.bf16.mxu0 0
        %344 = vmatpush1.bf16.msra.mxu0 0
        %345 = vmatprep.subr.bf16.mxu0 0
        %346 = vmatpush1.bf16.msra.mxu0 0
        %347 = vmatprep.subr.bf16.mxu0 %v317
        %348 = vmatpush1.bf16.msra.mxu0 %v316
        %349 = vmatprep.subr.bf16.mxu0 0
        %350 = vmatpush2.bf16.msra.mxu0 0
        %351 = vmatprep.subr.bf16.mxu0 0
        %352 = vmatpush2.bf16.msra.mxu0 0
        %353 = vmatprep.subr.bf16.mxu0 0
        %354 = vmatpush2.bf16.msra.mxu0 0
        %355 = vmatprep.subr.bf16.mxu0 0
        %356 = vmatpush2.bf16.msra.mxu0 0
        %357 = vmatprep.subr.bf16.mxu0 0
        %358 = vmatpush2.bf16.msra.mxu0 0
        %359 = vmatprep.subr.bf16.mxu0 0
        %360 = vmatpush2.bf16.msra.mxu0 0
        %361 = vmatprep.subr.bf16.mxu0 0
        %362 = vmatpush2.bf16.msra.mxu0 0
        %363 = vmatprep.subr.bf16.mxu0 0
        %364 = vmatpush2.bf16.msra.mxu0 0
        %365 = vmatprep.mubr.bf16.mxu0 0
        %366 = vmatmul.mubr.bf16.gmra.mxu0 %v322
        %v367 = vpop.f32.mrf.mxu0
        %v368 = vadd.f32 %v283, %v367
        %v369 = vpop.f32.mrf.mxu0
        %v370 = vadd.f32 %v287, %v369
        %v371 = vpop.f32.mrf.mxu0
        %v372 = vadd.f32 %v283, %v371
        %v373 = vpop.f32.mrf.mxu0
        %v374 = vadd.f32 %v287, %v373
        %375 = vmatprep.mubr.bf16.mxu0 0
        %376 = vmatmul.mubr.bf16.gmra.mxu0 %v325
        %v377 = vpop.f32.mrf.mxu0
        %v378 = vadd.f32 %v283, %v377
        %v379 = vpop.f32.mrf.mxu0
        %v380 = vadd.f32 %v287, %v379
        %v381 = vpop.f32.mrf.mxu0
        %v382 = vadd.f32 %v283, %v381
        %v383 = vpop.f32.mrf.mxu0
        %v384 = vadd.f32 %v287, %v383
        %385 = vmatprep.mubr.bf16.mxu0 0
        %386 = vmatmul.mubr.bf16.gmra.mxu0 %v328
        %v387 = vpop.f32.mrf.mxu0
        %v388 = vadd.f32 %v283, %v387
        %v389 = vpop.f32.mrf.mxu0
        %v390 = vadd.f32 %v287, %v389
        %v391 = vpop.f32.mrf.mxu0
        %v392 = vadd.f32 %v283, %v391
        %v393 = vpop.f32.mrf.mxu0
        %v394 = vadd.f32 %v287, %v393
        %395 = vmatprep.mubr.bf16.mxu0 0
        %396 = vmatmul.mubr.bf16.gmra.mxu0 %v331
        %v397 = vpop.f32.mrf.mxu0
        %v398 = vadd.f32 %v283, %v397
        %v399 = vpop.f32.mrf.mxu0
        %v400 = vadd.f32 %v287, %v399
        %v401 = vpop.f32.mrf.mxu0
        %v402 = vadd.f32 %v283, %v401
        %v403 = vpop.f32.mrf.mxu0
        %v404 = vadd.f32 %v287, %v403
        %405 = vdwg.mxu0
        %v406 = vpack.c.bf16 %v372, %v368
        %v407 = vpack.c.bf16 %v374, %v370
        %v408 = vpack.c.bf16 %v382, %v378
        %v409 = vpack.c.bf16 %v384, %v380
        %v410 = vpack.c.bf16 %v392, %v388
        %v411 = vpack.c.bf16 %v394, %v390
        %v412 = vpack.c.bf16 %v402, %v398
        %v413 = vpack.c.bf16 %v404, %v400
        %v422 = vunpack.c.l.b16 %v406
        %v423 = vunpack.c.l.b16 %v407
        %v424 = vunpack.c.h.b16 %v406
        %v425 = vunpack.c.h.b16 %v407
        %v426 = vunpack.c.l.b16 %v408
        %v427 = vunpack.c.l.b16 %v409
        %v428 = vunpack.c.h.b16 %v408
        %v429 = vunpack.c.h.b16 %v409
        %v430 = vunpack.c.l.b16 %v410
        %v431 = vunpack.c.l.b16 %v411
        %v432 = vunpack.c.h.b16 %v410
        %v433 = vunpack.c.h.b16 %v411
        %v434 = vunpack.c.l.b16 %v412
        %v435 = vunpack.c.l.b16 %v413
        %v436 = vunpack.c.h.b16 %v412
        %v437 = vunpack.c.h.b16 %v413
        %v438 = vpack.c.b16 %v423, %v422
        %v439 = vpack.c.b16 %v425, %v424
        %v440 = vpack.c.b16 %v427, %v426
        %v441 = vpack.c.b16 %v429, %v428
        %v442 = vpack.c.b16 %v431, %v430
        %v443 = vpack.c.b16 %v433, %v432
        %v444 = vpack.c.b16 %v435, %v434
        %v445 = vpack.c.b16 %v437, %v436
        %454 = vst [vmem:[%s252] sm:$0xff] %v438
        %455 = vst [vmem:[%s252 + $0x8] sm:$0xff] %v439
        %456 = vst [vmem:[%s252 + $0x10] sm:$0xff] %v440
        %457 = vst [vmem:[%s252 + $0x18] sm:$0xff] %v441
        %458 = vst [vmem:[%s252 + $0x20] sm:$0xff] %v442
        %459 = vst [vmem:[%s252 + $0x28] sm:$0xff] %v443
        %460 = vst [vmem:[%s252 + $0x30] sm:$0xff] %v444
        %461 = vst [vmem:[%s252 + $0x38] sm:$0xff] %v445
        %s462 = sand.u32 %s117, 1
        %s463 = scalar_lea.sflag [#allocation4], %s462
        %s464 = sand.u32 %s117, 1
        %s465 = smul.addr %s464, 64
        %s466 = scalar_lea.vmem [#allocation3], %s465
        // Predicated region
        $region71: #{tpu_custom_call.1} parent=65 // pred_check
          %p467 = pneg %p127
        $region72: #{tpu_custom_call.1} parent=65 // pred_check_branch
          %469 = sbr.rel (%p467) target = $region74
        $region73: #{tpu_custom_call.1} parent=65 // pred_region
          %s470 = smul.u32 8, %s21
          %s471 = smul.u32 2, %s22
          %s473 = ssub.s32 1024, 1024
          %474 = vsyncadd %s463, %s473
          %s475 = smul.addr %s470, 4
          %s476 = sadd.s32 %s471, %s475
          %s477 = smul.addr %s476, 64
          %s478 = scalar_lea.hbm %s3, %s477
          %s479 = sshll.u32 %s466, 4
          %s480 = int_to_ptr.vmem [resolvable:$true] %s479
          %485 = dma.vmem_to_hbm [thread:$0]  %s480, 1024, %s478, %s463, 128, 256, 8
        $region74: #{tpu_custom_call.1} parent=65 // pred_fallthru
          _
      $region66: #{tpu_custom_call.1} parent=5 // pred_fallthru
        _
      %p486 = scmp.le.s32.totalorder 2, %s12
      // Predicated region
      $region75: #{tpu_custom_call.1} parent=5 // pred_check
        %p487 = pneg %p486
      $region76: #{tpu_custom_call.1} parent=5 // pred_check_branch
        %489 = sbr.rel (%p487) target = $region78
      $region77: #{tpu_custom_call.1} parent=5 // pred_region
        %s490 = ssub.s32 %s12, 2
        // Predicated region
        $region79: #{tpu_custom_call.1} parent=77 // pred_check
          %p491 = pneg %p133
        $region80: #{tpu_custom_call.1} parent=77 // pred_check_branch
          %493 = sbr.rel (%p491) target = $region82
        $region81: #{tpu_custom_call.1} parent=77 // pred_region
          %s494 = sand.u32 %s118, 1
          %s495 = scalar_lea.sflag [#allocation4], %s494
          %s496 = sand.u32 %s118, 1
          %s497 = smul.addr %s496, 64
          %s498 = scalar_lea.vmem [#allocation3], %s497
          %499 = dma.done %s495, 1024
        $region82: #{tpu_custom_call.1} parent=77 // pred_fallthru
          _
      $region78: #{tpu_custom_call.1} parent=5 // pred_fallthru
        _
    $region6: #{tpu_custom_call.1} parent=1 // loop_footer
      %s16 = sadd.s32 1, %s12
    $region7: #{tpu_custom_call.1} parent=1 // loop_footer_branch
      %11 = sbr.rel target = $region3
    $region8: #{tpu_custom_call.1} parent=1 // loop_exit
      _
    %500 = vsyncpa [#allocation4], 1
    %s501 = scalar_lea.sflag [#allocation4], 1
    %502 = vsyncpa %s501, 1

</llo_original>
